<compile_context>
chip_gen: v7x
topology: tpu7x:2x2x1
jax: 0.10.0
libtpu: 0.0.40
codegen_flags: <defaults>
</compile_context>

<pallas_src>
import functools

import jax
import jax.numpy as jnp
from jax.experimental import pallas as pl
from jax.experimental.pallas import tpu as pltpu

_LANE = 128
_SUBLANE = 8


def _round_up(x, m):
    return (x + m - 1) // m * m


def _mlp_kernel(x_ref, w1_ref, b1_ref, w2_ref, b2_ref, o_ref):
    # x_ref : (TM, D_in)  bf16   streamed per grid step (double-buffered)
    # w1_ref: (D_in, Hp)  bf16   VMEM-resident across the grid
    # b1_ref: (1, Hp)     f32    VMEM-resident
    # w2_ref: (1, Hp)     f32    VMEM-resident (W2 stored as a row)
    # b2_ref: (1, 1)      f32    SMEM scalar
    # o_ref : (TM, 1)     f32
    # Layer 1 on the MXU: bf16 operands, f32 accumulation.
    h = jnp.dot(x_ref[...], w1_ref[...], preferred_element_type=jnp.float32)
    # Bias + ReLU in f32 on the VPU.
    h = jnp.maximum(h + b1_ref[...], 0.0)
    # Layer 2 has output width 1: an MXU matmul would use 1/256 of the array
    # and serialize behind layer 1, so do it as VPU multiply + XLU row-sum.
    y = jnp.sum(h * w2_ref[...], axis=-1, keepdims=True) + b2_ref[0, 0]
    o_ref[...] = y.astype(o_ref.dtype)


def prepare_params(w1, b1, w2, b2):
    """One-time parameter prep: pad hidden dim to a multiple of 128 and pick
    kernel-friendly layouts/dtypes.  Zero padding is exact: padded hidden
    units have zero weights and bias, so relu(0) = 0 contributes nothing."""
    d_in, h = w1.shape
    hp = _round_up(h, _LANE)
    w1p = jnp.zeros((d_in, hp), jnp.float32).at[:, :h].set(w1).astype(jnp.bfloat16)
    b1p = jnp.zeros((1, hp), jnp.float32).at[:, :h].set(jnp.reshape(b1, (1, h)))
    w2p = jnp.zeros((1, hp), jnp.float32).at[:, :h].set(jnp.reshape(w2, (1, h)))
    b2p = jnp.asarray(b2, jnp.float32).reshape(1, 1)
    return w1p, b1p, w2p, b2p


@functools.partial(jax.jit, static_argnames=("tm",))
def base_model_forward(x, w1p, b1p, w2p, b2p, *, tm=512):
    """Fused MLP forward: relu(x @ W1 + b1) @ W2 + b2 -> (batch, 1).

    `tm` is the batch tile (sweep 512/1024/2048 on v5e/v6e; prefer the
    smaller end on v7x, whose VMEM is 64 MiB).
    """
    batch, d_in = x.shape
    hp = w1p.shape[1]

    # Stream x as bf16 (halves HBM traffic of the dominant input stream).
    x = x.astype(jnp.bfloat16)

    # Effective tile + batch padding so the grid divides evenly.
    tm_eff = min(tm, max(_SUBLANE, _round_up(batch, _SUBLANE)))
    padded = _round_up(batch, tm_eff)
    if padded != batch:
        x = jnp.pad(x, ((0, padded - batch), (0, 0)))
    n_tiles = padded // tm_eff

    flops = int(2 * padded * d_in * hp + 3 * padded * hp)
    bytes_accessed = int(x.size * 2 + w1p.size * 2 +
                         (b1p.size + w2p.size + b2p.size + padded) * 4)

    y = pl.pallas_call(
        _mlp_kernel,
        out_shape=jax.ShapeDtypeStruct((padded, 1), jnp.float32),
        grid=(n_tiles,),
        in_specs=[
            pl.BlockSpec((tm_eff, d_in), lambda i: (i, 0)),      # x: streamed
            pl.BlockSpec((d_in, hp), lambda i: (0, 0)),          # W1: resident
            pl.BlockSpec((1, hp), lambda i: (0, 0)),             # b1: resident
            pl.BlockSpec((1, hp), lambda i: (0, 0)),             # W2 row: resident
            pl.BlockSpec(memory_space=pltpu.MemorySpace.SMEM),   # b2: scalar
        ],
        out_specs=pl.BlockSpec((tm_eff, 1), lambda i: (i, 0)),
        compiler_params=pltpu.CompilerParams(
            dimension_semantics=("parallel",),        # megacore on v7x
            vmem_limit_bytes=32 * 1024 * 1024,        # safe on 64 MiB v7x VMEM
        ),
        cost_estimate=pl.CostEstimate(
            flops=flops, transcendentals=0, bytes_accessed=bytes_accessed),
    )(x, w1p, b1p, w2p, b2p)

    return y[:batch]


def init_params(key, input_size, hidden_units):
    """Matches nn.Linear fan-in init; weights stored transposed (x @ W)."""
    k1, k2, k3, k4 = jax.random.split(key, 4)
    s1 = 1.0 / jnp.sqrt(jnp.float32(input_size))
    s2 = 1.0 / jnp.sqrt(jnp.float32(hidden_units))
    w1 = jax.random.uniform(k1, (input_size, hidden_units), jnp.float32, -s1, s1)
    b1 = jax.random.uniform(k2, (hidden_units,), jnp.float32, -s1, s1)
    w2 = jax.random.uniform(k3, (hidden_units, 1), jnp.float32, -s2, s2)
    b2 = jax.random.uniform(k4, (1,), jnp.float32, -s2, s2)
    return w1, b1, w2, b2


if __name__ == "__main__":
    batch, input_size, hidden_units = 1024, 32, 32

    key = jax.random.PRNGKey(0)
    kx, kp = jax.random.split(key)
    x = jax.random.normal(kx, (batch, input_size), dtype=jnp.float32)
    w1, b1, w2, b2 = init_params(kp, input_size, hidden_units)
    params = prepare_params(w1, b1, w2, b2)

    y = base_model_forward(x, *params, tm=512)
    y = jax.block_until_ready(y)

    # Pure-JAX reference: f32 math on the same bf16-rounded operands the
    # kernel's MXU sees (bf16 products are exact in f32, accumulation is f32).
    xb = x.astype(jnp.bfloat16).astype(jnp.float32)
    w1b = w1.astype(jnp.bfloat16).astype(jnp.float32)
    ref = jnp.maximum(xb @ w1b + b1[None, :], 0.0) @ w2 + b2[None, :]

    assert y.shape == (batch, 1)
    assert jnp.allclose(y, ref, atol=1e-4, rtol=1e-4), float(
        jnp.max(jnp.abs(y - ref)))

    print("KERNEL_OK")
</pallas_src>

<mosaic_0001>
module attributes {stable_mosaic.version = 11 : i64} {
  func.func @_mlp_kernel(%arg0: i32, %arg1: memref<512x32xbf16, #tpu.memory_space<vmem>>, %arg2: memref<32x128xbf16, #tpu.memory_space<vmem>>, %arg3: memref<1x128xf32, #tpu.memory_space<vmem>>, %arg4: memref<1x128xf32, #tpu.memory_space<vmem>>, %arg5: memref<1x1xf32, #tpu.memory_space<smem>>, %arg6: memref<512x1xf32, #tpu.memory_space<vmem>>) attributes {dimension_semantics = [#tpu.dimension_semantics<parallel>], iteration_bounds = array<i64: 2>, scalar_prefetch = 0 : i64, scratch_operands = 0 : i64, tpu.core_type = #tpu.core_type<tc>, window_params = [{transform_indices = @transform_0, window_bounds = array<i64: 512, 32>}, {pipeline_mode = #tpu.pipeline_mode<synchronous>, transform_indices = @transform_1, window_bounds = array<i64: 32, 128>}, {pipeline_mode = #tpu.pipeline_mode<synchronous>, transform_indices = @transform_2, window_bounds = array<i64: 1, 128>}, {pipeline_mode = #tpu.pipeline_mode<synchronous>, transform_indices = @transform_3, window_bounds = array<i64: 1, 128>}, {transform_indices = @transform_4, window_bounds = array<i64: 1, 1>}, {transform_indices = @transform_5, window_bounds = array<i64: 512, 1>}]} {
    %c0 = arith.constant 0 : index
    %c0_0 = arith.constant 0 : index
    %0 = vector.load %arg1[%c0, %c0_0] : memref<512x32xbf16, #tpu.memory_space<vmem>>, vector<512x32xbf16>
    %c0_1 = arith.constant 0 : index
    %c0_2 = arith.constant 0 : index
    %1 = vector.load %arg2[%c0_1, %c0_2] : memref<32x128xbf16, #tpu.memory_space<vmem>>, vector<32x128xbf16>
    %cst = arith.constant dense<0.000000e+00> : vector<512x128xf32>
    %2 = tpu.matmul %0, %1, %cst {dimension_numbers = #tpu.dot_dimension_numbers<[1], [0], [0], [1], [0, 0, 1, 1], [], []>} : vector<512x32xbf16>, vector<32x128xbf16>, vector<512x128xf32> -> vector<512x128xf32>
    %c0_3 = arith.constant 0 : index
    %c0_4 = arith.constant 0 : index
    %3 = vector.load %arg3[%c0_3, %c0_4] : memref<1x128xf32, #tpu.memory_space<vmem>>, vector<1x128xf32>
    %4 = vector.broadcast %3 : vector<1x128xf32> to vector<512x128xf32>
    %5 = arith.addf %2, %4 : vector<512x128xf32>
    %cst_5 = arith.constant 0.000000e+00 : f32
    %6 = vector.broadcast %cst_5 : f32 to vector<512x128xf32>
    %7 = arith.maximumf %5, %6 : vector<512x128xf32>
    %c0_6 = arith.constant 0 : index
    %c0_7 = arith.constant 0 : index
    %8 = vector.load %arg4[%c0_6, %c0_7] : memref<1x128xf32, #tpu.memory_space<vmem>>, vector<1x128xf32>
    %9 = vector.broadcast %8 : vector<1x128xf32> to vector<512x128xf32>
    %10 = arith.mulf %7, %9 : vector<512x128xf32>
    %cst_8 = arith.constant dense<0.000000e+00> : vector<512xf32>
    %11 = vector.multi_reduction <add>, %10, %cst_8 [1] : vector<512x128xf32> to vector<512xf32>
    %12 = vector.shape_cast %11 : vector<512xf32> to vector<512x1xf32>
    %c0_9 = arith.constant 0 : index
    %c0_10 = arith.constant 0 : index
    %13 = memref.load %arg5[%c0_9, %c0_10] : memref<1x1xf32, #tpu.memory_space<smem>>
    %14 = vector.broadcast %13 : f32 to vector<512x1xf32>
    %15 = arith.addf %12, %14 : vector<512x1xf32>
    %c0_11 = arith.constant 0 : index
    %c0_12 = arith.constant 0 : index
    %16 = vector.load %arg6[%c0_11, %c0_12] : memref<512x1xf32, #tpu.memory_space<vmem>>, vector<512x1xf32>
    tpu.vector_store %arg6[%c0_11, %c0_12], %15 {strides = array<i32>} : memref<512x1xf32, #tpu.memory_space<vmem>>, vector<512x1xf32>,
    return
  }
  func.func @transform_0(%arg0: i32) -> (i32, i32) {
    %c0_i32 = arith.constant 0 : i32
    %c0_i32_0 = arith.constant 0 : i32
    return %arg0, %c0_i32 : i32, i32
  }
  func.func @transform_1(%arg0: i32) -> (i32, i32) {
    %c0_i32 = arith.constant 0 : i32
    %c0_i32_0 = arith.constant 0 : i32
    %c0_i32_1 = arith.constant 0 : i32
    return %c0_i32, %c0_i32_0 : i32, i32
  }
  func.func @transform_2(%arg0: i32) -> (i32, i32) {
    %c0_i32 = arith.constant 0 : i32
    %c0_i32_0 = arith.constant 0 : i32
    %c0_i32_1 = arith.constant 0 : i32
    return %c0_i32, %c0_i32_0 : i32, i32
  }
  func.func @transform_3(%arg0: i32) -> (i32, i32) {
    %c0_i32 = arith.constant 0 : i32
    %c0_i32_0 = arith.constant 0 : i32
    %c0_i32_1 = arith.constant 0 : i32
    return %c0_i32, %c0_i32_0 : i32, i32
  }
  func.func @transform_4(%arg0: i32) -> (i32, i32) {
    %c0_i32 = arith.constant 0 : i32
    %c0_i32_0 = arith.constant 0 : i32
    %c0_i32_1 = arith.constant 0 : i32
    return %c0_i32, %c0_i32_0 : i32, i32
  }
  func.func @transform_5(%arg0: i32) -> (i32, i32) {
    %c0_i32 = arith.constant 0 : i32
    %c0_i32_0 = arith.constant 0 : i32
    return %arg0, %c0_i32 : i32, i32
  }
}

</mosaic_0001>

<llo_original>
// kernel: base_model_forward.1
$region0: #{base_model_forward.1}
  #allocation0 [shape = 'u32[]', space=smem, size = 0x4, offset = 0x4, fixed_abs, tag = 'smem constant byte address 0x4 - core index']
  #allocation1 [shape = 'u32[144,128]{1,0:T(1,128)}', space=vmem, size = 0x12000, scoped, tag = 'internal scratch']
  #allocation2 [shape = 'f32[1,1]{1,0:T(1,128)S(6)}', space=smem, size = 0x200, scoped, tag = 'scoped memory for base_model_forward.1']
  %s0 = inlined_call_operand.vmem [shape: bf16[1024,32], index: 0, kind: input, shape index: {}]
  %s1 = inlined_call_operand.vmem [shape: bf16[32,128], index: 1, kind: input, shape index: {}]
  %s2 = inlined_call_operand.vmem [shape: f32[1,128], index: 2, kind: input, shape index: {}]
  %s3 = inlined_call_operand.vmem [shape: f32[1,128], index: 3, kind: input, shape index: {}]
  %s4 = inlined_call_operand.<no memory space> [shape: f32[1,1], index: 4, kind: input, shape index: {}]
  %s5 = inlined_call_operand.vmem [shape: f32[1024,1], index: 5, kind: output, shape index: {}]
  %s6 = sld [smem:[#allocation0]]
  $region53: #{base_model_forward.1} parent=0
    _
  %s8 = ssub.s32 1, %s6
  %s9 = scalar_select 0, %s8, %s6
  %10 = sst [smem:[#allocation2]] %s4
  loop: start=0, step=1, limit=4
  $region2: #{base_model_forward.1} parent=0 // loop_pre_header
    _
  $region3: #{base_model_forward.1} parent=0 // loop_header
    %s12 = sphi 0, %s16
    %p13 = scmp.ge.s32.totalorder %s12, 4
    %s22 = sphi 0, %s24
    %s25 = sphi 0, %s22
    %s26 = sphi 0, %s25
    %s42 = sphi 0, %s26
    %s46 = sphi 0, %s46
    %s48 = sphi 0, %s46
    %s49 = sphi 0, %s48
    %s63 = sphi 0, %s49
    %s67 = sphi 0, %s67
    %s69 = sphi 0, %s67
    %s70 = sphi 0, %s69
    %s84 = sphi 0, %s70
    %s88 = sphi 0, %s88
    %s90 = sphi 0, %s88
    %s91 = sphi 0, %s90
    %s105 = sphi 0, %s91
    %s109 = sphi 0, %s109
    %s111 = sphi 0, %s109
    %s112 = sphi 0, %s111
    %s126 = sphi 0, %s112
    %s132 = sphi 0, %s134
    %s135 = sphi 0, %s132
    %s136 = sphi 0, %s135
    %s152 = sphi 0, %s136
  $region4: #{base_model_forward.1} parent=0 // loop_header_branch
    %15 = sbr.rel (%p13) target = $region8
  $region5: #{base_model_forward.1} parent=0 // loop_body
    %s17 = ssub.s32 %s12, 1
    %s18 = ssub.s32 %s12, 2
    %s19 = sadd.s32 %s12, 1
    %s20 = ssub.s32 %s12, %s19
    %p21 = scmp.eq.s32.totalorder %s20, 0
    %s23 = sadd.s32 %s22, 1
    %s24 = scalar_select %p21, %s22, %s23
    %p27 = pneg %p21
    %p28 = scmp.eq.s32.totalorder %s12, 1
    %p29 = por %p27, %p28
    %p30 = scmp.ne.s32.totalorder %s22, %s25
    %p31 = scmp.eq.s32.totalorder %s12, 0
    %p32 = por %p30, %p31
    %p33 = scmp.ne.s32.totalorder %s22, %s25
    %p34 = scmp.eq.s32.totalorder %s17, 1
    %p35 = por %p33, %p34
    %p36 = scmp.ne.s32.totalorder %s25, %s26
    %p37 = scmp.eq.s32.totalorder %s17, 0
    %p38 = por %p36, %p37
    %p39 = scmp.ne.s32.totalorder %s25, %s26
    %p40 = scmp.eq.s32.totalorder %s18, 1
    %p41 = por %p39, %p40
    %p43 = scmp.ne.s32.totalorder %s26, %s42
    %p44 = scmp.eq.s32.totalorder %s18, 0
    %p45 = por %p43, %p44
    %s47 = sadd.s32 %s46, 1
    %p50 = scmp.eq.s32.totalorder %s12, 1
    %p51 = scmp.ne.s32.totalorder %s46, %s48
    %p52 = scmp.eq.s32.totalorder %s12, 0
    %p53 = por %p51, %p52
    %p54 = scmp.ne.s32.totalorder %s46, %s48
    %p55 = scmp.eq.s32.totalorder %s17, 1
    %p56 = por %p54, %p55
    %p57 = scmp.ne.s32.totalorder %s48, %s49
    %p58 = scmp.eq.s32.totalorder %s17, 0
    %p59 = por %p57, %p58
    %p60 = scmp.ne.s32.totalorder %s48, %s49
    %p61 = scmp.eq.s32.totalorder %s18, 1
    %p62 = por %p60, %p61
    %p64 = scmp.ne.s32.totalorder %s49, %s63
    %p65 = scmp.eq.s32.totalorder %s18, 0
    %p66 = por %p64, %p65
    %s68 = sadd.s32 %s67, 1
    %p71 = scmp.eq.s32.totalorder %s12, 1
    %p72 = scmp.ne.s32.totalorder %s67, %s69
    %p73 = scmp.eq.s32.totalorder %s12, 0
    %p74 = por %p72, %p73
    %p75 = scmp.ne.s32.totalorder %s67, %s69
    %p76 = scmp.eq.s32.totalorder %s17, 1
    %p77 = por %p75, %p76
    %p78 = scmp.ne.s32.totalorder %s69, %s70
    %p79 = scmp.eq.s32.totalorder %s17, 0
    %p80 = por %p78, %p79
    %p81 = scmp.ne.s32.totalorder %s69, %s70
    %p82 = scmp.eq.s32.totalorder %s18, 1
    %p83 = por %p81, %p82
    %p85 = scmp.ne.s32.totalorder %s70, %s84
    %p86 = scmp.eq.s32.totalorder %s18, 0
    %p87 = por %p85, %p86
    %s89 = sadd.s32 %s88, 1
    %p92 = scmp.eq.s32.totalorder %s12, 1
    %p93 = scmp.ne.s32.totalorder %s88, %s90
    %p94 = scmp.eq.s32.totalorder %s12, 0
    %p95 = por %p93, %p94
    %p96 = scmp.ne.s32.totalorder %s88, %s90
    %p97 = scmp.eq.s32.totalorder %s17, 1
    %p98 = por %p96, %p97
    %p99 = scmp.ne.s32.totalorder %s90, %s91
    %p100 = scmp.eq.s32.totalorder %s17, 0
    %p101 = por %p99, %p100
    %p102 = scmp.ne.s32.totalorder %s90, %s91
    %p103 = scmp.eq.s32.totalorder %s18, 1
    %p104 = por %p102, %p103
    %p106 = scmp.ne.s32.totalorder %s91, %s105
    %p107 = scmp.eq.s32.totalorder %s18, 0
    %p108 = por %p106, %p107
    %s110 = sadd.s32 %s109, 1
    %p113 = scmp.eq.s32.totalorder %s12, 1
    %p114 = scmp.ne.s32.totalorder %s109, %s111
    %p115 = scmp.eq.s32.totalorder %s12, 0
    %p116 = por %p114, %p115
    %p117 = scmp.ne.s32.totalorder %s109, %s111
    %p118 = scmp.eq.s32.totalorder %s17, 1
    %p119 = por %p117, %p118
    %p120 = scmp.ne.s32.totalorder %s111, %s112
    %p121 = scmp.eq.s32.totalorder %s17, 0
    %p122 = por %p120, %p121
    %p123 = scmp.ne.s32.totalorder %s111, %s112
    %p124 = scmp.eq.s32.totalorder %s18, 1
    %p125 = por %p123, %p124
    %p127 = scmp.ne.s32.totalorder %s112, %s126
    %p128 = scmp.eq.s32.totalorder %s18, 0
    %p129 = por %p127, %p128
    %s130 = ssub.s32 %s12, %s19
    %p131 = scmp.eq.s32.totalorder %s130, 0
    %s133 = sadd.s32 %s132, 1
    %s134 = scalar_select %p131, %s132, %s133
    %p137 = pneg %p131
    %p138 = scmp.eq.s32.totalorder %s12, 1
    %p139 = por %p137, %p138
    %p140 = scmp.ne.s32.totalorder %s132, %s135
    %p141 = scmp.eq.s32.totalorder %s12, 0
    %p142 = por %p140, %p141
    %p143 = scmp.ne.s32.totalorder %s132, %s135
    %p144 = scmp.eq.s32.totalorder %s17, 1
    %p145 = por %p143, %p144
    %p146 = scmp.ne.s32.totalorder %s135, %s136
    %p147 = scmp.eq.s32.totalorder %s17, 0
    %p148 = por %p146, %p147
    %p149 = scmp.ne.s32.totalorder %s135, %s136
    %p150 = scmp.eq.s32.totalorder %s18, 1
    %p151 = por %p149, %p150
    %p153 = scmp.ne.s32.totalorder %s136, %s152
    %p154 = scmp.eq.s32.totalorder %s18, 0
    %p155 = por %p153, %p154
    %p156 = scmp.le.s32.totalorder 1, %s12
    %p157 = scmp.lt.s32.totalorder %s12, 3
    %p158 = pnand %p156, %p157
    %p159 = pneg %p158
    // Predicated region
    $region9: #{base_model_forward.1} parent=5 // pred_check
      _
    $region10: #{base_model_forward.1} parent=5 // pred_check_branch
      %161 = sbr.rel (%p158) target = $region12
    $region11: #{base_model_forward.1} parent=5 // pred_region
      %s162 = ssub.s32 %s12, 1
      // Predicated region
      $region13: #{base_model_forward.1} parent=11 // pred_check
        %p163 = pneg %p59
      $region14: #{base_model_forward.1} parent=11 // pred_check_branch
        %165 = sbr.rel (%p163) target = $region16
      $region15: #{base_model_forward.1} parent=11 // pred_region
        _
      $region16: #{base_model_forward.1} parent=11 // pred_fallthru
        _
      // Predicated region
      $region17: #{base_model_forward.1} parent=11 // pred_check
        %p166 = pneg %p80
      $region18: #{base_model_forward.1} parent=11 // pred_check_branch
        %168 = sbr.rel (%p166) target = $region20
      $region19: #{base_model_forward.1} parent=11 // pred_region
        _
      $region20: #{base_model_forward.1} parent=11 // pred_fallthru
        _
      // Predicated region
      $region21: #{base_model_forward.1} parent=11 // pred_check
        %p169 = pneg %p101
      $region22: #{base_model_forward.1} parent=11 // pred_check_branch
        %171 = sbr.rel (%p169) target = $region24
      $region23: #{base_model_forward.1} parent=11 // pred_region
        _
      $region24: #{base_model_forward.1} parent=11 // pred_fallthru
        _
      // Predicated region
      $region25: #{base_model_forward.1} parent=11 // pred_check
        %p172 = pneg %p122
      $region26: #{base_model_forward.1} parent=11 // pred_check_branch
        %174 = sbr.rel (%p172) target = $region28
      $region27: #{base_model_forward.1} parent=11 // pred_region
        _
      $region28: #{base_model_forward.1} parent=11 // pred_fallthru
        _
    $region12: #{base_model_forward.1} parent=5 // pred_fallthru
      _
    %p175 = scmp.lt.s32.totalorder %s12, 2
    // Predicated region
    $region29: #{base_model_forward.1} parent=5 // pred_check
      %p176 = pneg %p175
    $region30: #{base_model_forward.1} parent=5 // pred_check_branch
      %178 = sbr.rel (%p176) target = $region32
    $region31: #{base_model_forward.1} parent=5 // pred_region
      // Predicated region
      $region33: #{base_model_forward.1} parent=31 // pred_check
        %p179 = pneg %p32
      $region34: #{base_model_forward.1} parent=31 // pred_check_branch
        %181 = sbr.rel (%p179) target = $region36
      $region35: #{base_model_forward.1} parent=31 // pred_region
        %s182 = smul.u32 64, %s12
        %p183 = scmp.lt.s32.totalorder %s182, 127
        %s184 = scalar_select %p183, %s182, 127
        %s185 = smul.addr %s184, 4
        %s186 = scalar_lea.vmem %s0, %s185
        %s187 = smul.u32 64, %s12
      $region36: #{base_model_forward.1} parent=31 // pred_fallthru
        _
    $region32: #{base_model_forward.1} parent=5 // pred_fallthru
      _
    %p188 = scmp.le.s32.totalorder 1, %s12
    %p189 = scmp.lt.s32.totalorder %s12, 3
    %p190 = pnand %p188, %p189
    %p191 = pneg %p190
    // Predicated region
    $region37: #{base_model_forward.1} parent=5 // pred_check
      _
    $region38: #{base_model_forward.1} parent=5 // pred_check_branch
      %193 = sbr.rel (%p190) target = $region40
    $region39: #{base_model_forward.1} parent=5 // pred_region
      %s194 = ssub.s32 %s12, 1
      %s195 = smul.u32 64, %s17
      %p196 = scmp.lt.s32.totalorder %s195, 127
      %s197 = scalar_select %p196, %s195, 127
      %s198 = smul.addr %s197, 4
      %s199 = scalar_lea.vmem %s0, %s198
      %p200 = pneg %p38
      %p201 = pneg %p35
      %p202 = pneg %p59
      %p203 = pneg %p56
      %p204 = pneg %p80
      %p205 = pneg %p77
      %p206 = pneg %p101
      %p207 = pneg %p98
      %p208 = pneg %p122
      %p209 = pneg %p119
      %p210 = pneg %p148
      %p211 = pneg %p145
      %s212 = smul.u32 64, %s17
      %p213 = scmp.lt.s32.totalorder %s212, 127
      %s214 = scalar_select %p213, %s212, 127
      %s215 = smul.addr %s214, 8
      %s216 = scalar_lea.vmem %s5, %s215
      %s217 = smul.u32 64, %s17
      %p218 = scmp.lt.s32.totalorder %s217, 127
      %s219 = scalar_select %p218, %s217, 127
      %s220 = smul.addr %s219, 4
      %s221 = scalar_lea.vmem %s0, %s220
      %s222 = smul.u32 64, %s17
      %s223 = smul.u32 64, %s17
      %p224 = scmp.lt.s32.totalorder %s223, 127
      %s225 = scalar_select %p224, %s223, 127
      %s226 = smul.addr %s225, 8
      %s227 = scalar_lea.vmem %s5, %s226
      %s228 = smul.u32 64, %s17
      %v230 = vld [vmem:[%s221] sm:$0xf]
      %v231 = vld [vmem:[%s221 + $0x4] sm:$0xf]
      %v232 = vld [vmem:[%s221 + $0x8] sm:$0xf]
      %v233 = vld [vmem:[%s221 + $0xc] sm:$0xf]
      %v234 = vld [vmem:[%s221 + $0x10] sm:$0xf]
      %v235 = vld [vmem:[%s221 + $0x14] sm:$0xf]
      %v236 = vld [vmem:[%s221 + $0x18] sm:$0xf]
      %v237 = vld [vmem:[%s221 + $0x1c] sm:$0xf]
      %v238 = vld [vmem:[%s221 + $0x20] sm:$0xf]
      %v239 = vld [vmem:[%s221 + $0x24] sm:$0xf]
      %v240 = vld [vmem:[%s221 + $0x28] sm:$0xf]
      %v241 = vld [vmem:[%s221 + $0x2c] sm:$0xf]
      %v242 = vld [vmem:[%s221 + $0x30] sm:$0xf]
      %v243 = vld [vmem:[%s221 + $0x34] sm:$0xf]
      %v244 = vld [vmem:[%s221 + $0x38] sm:$0xf]
      %v245 = vld [vmem:[%s221 + $0x3c] sm:$0xf]
      %v246 = vld [vmem:[%s221 + $0x40] sm:$0xf]
      %v247 = vld [vmem:[%s221 + $0x44] sm:$0xf]
      %v248 = vld [vmem:[%s221 + $0x48] sm:$0xf]
      %v249 = vld [vmem:[%s221 + $0x4c] sm:$0xf]
      %v250 = vld [vmem:[%s221 + $0x50] sm:$0xf]
      %v251 = vld [vmem:[%s221 + $0x54] sm:$0xf]
      %v252 = vld [vmem:[%s221 + $0x58] sm:$0xf]
      %v253 = vld [vmem:[%s221 + $0x5c] sm:$0xf]
      %v254 = vld [vmem:[%s221 + $0x60] sm:$0xf]
      %v255 = vld [vmem:[%s221 + $0x64] sm:$0xf]
      %v256 = vld [vmem:[%s221 + $0x68] sm:$0xf]
      %v257 = vld [vmem:[%s221 + $0x6c] sm:$0xf]
      %v258 = vld [vmem:[%s221 + $0x70] sm:$0xf]
      %v259 = vld [vmem:[%s221 + $0x74] sm:$0xf]
      %v260 = vld [vmem:[%s221 + $0x78] sm:$0xf]
      %v261 = vld [vmem:[%s221 + $0x7c] sm:$0xf]
      %v262 = vld [vmem:[%s221 + $0x80] sm:$0xf]
      %v263 = vld [vmem:[%s221 + $0x84] sm:$0xf]
      %v264 = vld [vmem:[%s221 + $0x88] sm:$0xf]
      %v265 = vld [vmem:[%s221 + $0x8c] sm:$0xf]
      %v266 = vld [vmem:[%s221 + $0x90] sm:$0xf]
      %v267 = vld [vmem:[%s221 + $0x94] sm:$0xf]
      %v268 = vld [vmem:[%s221 + $0x98] sm:$0xf]
      %v269 = vld [vmem:[%s221 + $0x9c] sm:$0xf]
      %v270 = vld [vmem:[%s221 + $0xa0] sm:$0xf]
      %v271 = vld [vmem:[%s221 + $0xa4] sm:$0xf]
      %v272 = vld [vmem:[%s221 + $0xa8] sm:$0xf]
      %v273 = vld [vmem:[%s221 + $0xac] sm:$0xf]
      %v274 = vld [vmem:[%s221 + $0xb0] sm:$0xf]
      %v275 = vld [vmem:[%s221 + $0xb4] sm:$0xf]
      %v276 = vld [vmem:[%s221 + $0xb8] sm:$0xf]
      %v277 = vld [vmem:[%s221 + $0xbc] sm:$0xf]
      %v278 = vld [vmem:[%s221 + $0xc0] sm:$0xf]
      %v279 = vld [vmem:[%s221 + $0xc4] sm:$0xf]
      %v280 = vld [vmem:[%s221 + $0xc8] sm:$0xf]
      %v281 = vld [vmem:[%s221 + $0xcc] sm:$0xf]
      %v282 = vld [vmem:[%s221 + $0xd0] sm:$0xf]
      %v283 = vld [vmem:[%s221 + $0xd4] sm:$0xf]
      %v284 = vld [vmem:[%s221 + $0xd8] sm:$0xf]
      %v285 = vld [vmem:[%s221 + $0xdc] sm:$0xf]
      %v286 = vld [vmem:[%s221 + $0xe0] sm:$0xf]
      %v287 = vld [vmem:[%s221 + $0xe4] sm:$0xf]
      %v288 = vld [vmem:[%s221 + $0xe8] sm:$0xf]
      %v289 = vld [vmem:[%s221 + $0xec] sm:$0xf]
      %v290 = vld [vmem:[%s221 + $0xf0] sm:$0xf]
      %v291 = vld [vmem:[%s221 + $0xf4] sm:$0xf]
      %v292 = vld [vmem:[%s221 + $0xf8] sm:$0xf]
      %v293 = vld [vmem:[%s221 + $0xfc] sm:$0xf]
      %v294 = vld [vmem:[%s1] sm:$0xf]
      %v295 = vld [vmem:[%s1 + $0x4] sm:$0xf]
      %v296 = vld [vmem:[%s1 + $0x8] sm:$0xf]
      %v297 = vld [vmem:[%s1 + $0xc] sm:$0xf]
      %v298 = vld [vmem:[%s2] sm:$0x1]
      %v300 = vlaneseq
      %v301 = vshrl.u32 %v300, 7
      %v302 = vsub.s32 0, %v301
      %v303 = vrot.slane %v298, %v302
      %v369 = vunpack.c.l.b16 %v230
      %v370 = vunpack.c.l.b16 %v231
      %v371 = vunpack.c.l.b16 %v232
      %v372 = vunpack.c.l.b16 %v233
      %v373 = vunpack.c.l.b16 %v234
      %v374 = vunpack.c.l.b16 %v235
      %v375 = vunpack.c.l.b16 %v236
      %v376 = vunpack.c.l.b16 %v237
      %v377 = vunpack.c.l.b16 %v238
      %v378 = vunpack.c.l.b16 %v239
      %v379 = vunpack.c.l.b16 %v240
      %v380 = vunpack.c.l.b16 %v241
      %v381 = vunpack.c.l.b16 %v242
      %v382 = vunpack.c.l.b16 %v243
      %v383 = vunpack.c.l.b16 %v244
      %v384 = vunpack.c.l.b16 %v245
      %v385 = vunpack.c.l.b16 %v246
      %v386 = vunpack.c.l.b16 %v247
      %v387 = vunpack.c.l.b16 %v248
      %v388 = vunpack.c.l.b16 %v249
      %v389 = vunpack.c.l.b16 %v250
      %v390 = vunpack.c.l.b16 %v251
      %v391 = vunpack.c.l.b16 %v252
      %v392 = vunpack.c.l.b16 %v253
      %v393 = vunpack.c.l.b16 %v254
      %v394 = vunpack.c.l.b16 %v255
      %v395 = vunpack.c.l.b16 %v256
      %v396 = vunpack.c.l.b16 %v257
      %v397 = vunpack.c.l.b16 %v258
      %v398 = vunpack.c.l.b16 %v259
      %v399 = vunpack.c.l.b16 %v260
      %v400 = vunpack.c.l.b16 %v261
      %v401 = vunpack.c.l.b16 %v262
      %v402 = vunpack.c.l.b16 %v263
      %v403 = vunpack.c.l.b16 %v264
      %v404 = vunpack.c.l.b16 %v265
      %v405 = vunpack.c.l.b16 %v266
      %v406 = vunpack.c.l.b16 %v267
      %v407 = vunpack.c.l.b16 %v268
      %v408 = vunpack.c.l.b16 %v269
      %v409 = vunpack.c.l.b16 %v270
      %v410 = vunpack.c.l.b16 %v271
      %v411 = vunpack.c.l.b16 %v272
      %v412 = vunpack.c.l.b16 %v273
      %v413 = vunpack.c.l.b16 %v274
      %v414 = vunpack.c.l.b16 %v275
      %v415 = vunpack.c.l.b16 %v276
      %v416 = vunpack.c.l.b16 %v277
      %v417 = vunpack.c.l.b16 %v278
      %v418 = vunpack.c.l.b16 %v279
      %v419 = vunpack.c.l.b16 %v280
      %v420 = vunpack.c.l.b16 %v281
      %v421 = vunpack.c.l.b16 %v282
      %v422 = vunpack.c.l.b16 %v283
      %v423 = vunpack.c.l.b16 %v284
      %v424 = vunpack.c.l.b16 %v285
      %v425 = vunpack.c.l.b16 %v286
      %v426 = vunpack.c.l.b16 %v287
      %v427 = vunpack.c.l.b16 %v288
      %v428 = vunpack.c.l.b16 %v289
      %v429 = vunpack.c.l.b16 %v290
      %v430 = vunpack.c.l.b16 %v291
      %v431 = vunpack.c.l.b16 %v292
      %v432 = vunpack.c.l.b16 %v293
      %v433 = vpack.c.b16 %v370, %v369
      %v434 = vpack.c.b16 %v372, %v371
      %v435 = vpack.c.b16 %v374, %v373
      %v436 = vpack.c.b16 %v376, %v375
      %v437 = vpack.c.b16 %v378, %v377
      %v438 = vpack.c.b16 %v380, %v379
      %v439 = vpack.c.b16 %v382, %v381
      %v440 = vpack.c.b16 %v384, %v383
      %v441 = vpack.c.b16 %v386, %v385
      %v442 = vpack.c.b16 %v388, %v387
      %v443 = vpack.c.b16 %v390, %v389
      %v444 = vpack.c.b16 %v392, %v391
      %v445 = vpack.c.b16 %v394, %v393
      %v446 = vpack.c.b16 %v396, %v395
      %v447 = vpack.c.b16 %v398, %v397
      %v448 = vpack.c.b16 %v400, %v399
      %v449 = vpack.c.b16 %v402, %v401
      %v450 = vpack.c.b16 %v404, %v403
      %v451 = vpack.c.b16 %v406, %v405
      %v452 = vpack.c.b16 %v408, %v407
      %v453 = vpack.c.b16 %v410, %v409
      %v454 = vpack.c.b16 %v412, %v411
      %v455 = vpack.c.b16 %v414, %v413
      %v456 = vpack.c.b16 %v416, %v415
      %v457 = vpack.c.b16 %v418, %v417
      %v458 = vpack.c.b16 %v420, %v419
      %v459 = vpack.c.b16 %v422, %v421
      %v460 = vpack.c.b16 %v424, %v423
      %v461 = vpack.c.b16 %v426, %v425
      %v462 = vpack.c.b16 %v428, %v427
      %v463 = vpack.c.b16 %v430, %v429
      %v464 = vpack.c.b16 %v432, %v431
      %v469 = vunpack.c.l.b16 %v294
      %v470 = vunpack.c.l.b16 %v295
      %v471 = vunpack.c.l.b16 %v296
      %v472 = vunpack.c.l.b16 %v297
      %v473 = vpack.c.b16 %v470, %v469
      %v474 = vpack.c.b16 %v472, %v471
      %vm477 = vcmask 261120
      %v479 = vsel %vm477, %v433, 0
      %v482 = vsel %vm477, %v434, 0
      %v485 = vsel %vm477, %v435, 0
      %v488 = vsel %vm477, %v436, 0
      %v491 = vsel %vm477, %v437, 0
      %v494 = vsel %vm477, %v438, 0
      %v497 = vsel %vm477, %v439, 0
      %v500 = vsel %vm477, %v440, 0
      %v503 = vsel %vm477, %v441, 0
      %v506 = vsel %vm477, %v442, 0
      %v509 = vsel %vm477, %v443, 0
      %v512 = vsel %vm477, %v444, 0
      %v515 = vsel %vm477, %v445, 0
      %v518 = vsel %vm477, %v446, 0
      %v521 = vsel %vm477, %v447, 0
      %v524 = vsel %vm477, %v448, 0
      %v527 = vsel %vm477, %v449, 0
      %v530 = vsel %vm477, %v450, 0
      %v533 = vsel %vm477, %v451, 0
      %v536 = vsel %vm477, %v452, 0
      %v539 = vsel %vm477, %v453, 0
      %v542 = vsel %vm477, %v454, 0
      %v545 = vsel %vm477, %v455, 0
      %v548 = vsel %vm477, %v456, 0
      %v551 = vsel %vm477, %v457, 0
      %v554 = vsel %vm477, %v458, 0
      %v557 = vsel %vm477, %v459, 0
      %v560 = vsel %vm477, %v460, 0
      %v563 = vsel %vm477, %v461, 0
      %v566 = vsel %vm477, %v462, 0
      %v569 = vsel %vm477, %v463, 0
      %v572 = vsel %vm477, %v464, 0
      %574 = vmatprep.subr.bf16.mxu0 0
      %575 = vmatpush1.bf16.msra.mxu0 %v473
      %576 = vmatprep.subr.bf16.mxu0 0
      %577 = vmatpush1.bf16.msra.mxu0 %v474
      %578 = vmatprep.subr.bf16.mxu0 0
      %579 = vmatpush1.bf16.msra.mxu0 0
      %580 = vmatprep.subr.bf16.mxu0 0
      %581 = vmatpush1.bf16.msra.mxu0 0
      %582 = vmatprep.subr.bf16.mxu0 0
      %583 = vmatpush1.bf16.msra.mxu0 0
      %584 = vmatprep.subr.bf16.mxu0 0
      %585 = vmatpush1.bf16.msra.mxu0 0
      %586 = vmatprep.subr.bf16.mxu0 0
      %587 = vmatpush1.bf16.msra.mxu0 0
      %588 = vmatprep.subr.bf16.mxu0 0
      %589 = vmatpush1.bf16.msra.mxu0 0
      %590 = vmatprep.subr.bf16.mxu0 0
      %591 = vmatpush1.bf16.msra.mxu0 0
      %592 = vmatprep.subr.bf16.mxu0 0
      %593 = vmatpush1.bf16.msra.mxu0 0
      %594 = vmatprep.subr.bf16.mxu0 0
      %595 = vmatpush1.bf16.msra.mxu0 0
      %596 = vmatprep.subr.bf16.mxu0 0
      %597 = vmatpush1.bf16.msra.mxu0 0
      %598 = vmatprep.subr.bf16.mxu0 0
      %599 = vmatpush1.bf16.msra.mxu0 0
      %600 = vmatprep.subr.bf16.mxu0 0
      %601 = vmatpush1.bf16.msra.mxu0 0
      %602 = vmatprep.subr.bf16.mxu0 0
      %603 = vmatpush1.bf16.msra.mxu0 0
      %604 = vmatprep.subr.bf16.mxu0 0
      %605 = vmatpush1.bf16.msra.mxu0 0
      %606 = vmatprep.mubr.bf16.mxu0 0
      %607 = vmatmul.mubr.bf16.gmra.mrb[0].mxu0 %v479
      %v608 = vpop.f32.mrb[0].mxu0
      %v609 = vadd.f32 %v303, %v608
      %v610 = vpop.f32.mrb[0].mxu0
      %v611 = vpop.f32.mrb[0].mxu0
      %v612 = vadd.f32 %v303, %v611
      %v613 = vpop.f32.mrb[0].mxu0
      %614 = vmatprep.mubr.bf16.mxu0 0
      %615 = vmatmul.mubr.bf16.gmra.mrb[0].mxu0 %v482
      %v616 = vpop.f32.mrb[0].mxu0
      %v617 = vadd.f32 %v303, %v616
      %v618 = vpop.f32.mrb[0].mxu0
      %v619 = vpop.f32.mrb[0].mxu0
      %v620 = vadd.f32 %v303, %v619
      %v621 = vpop.f32.mrb[0].mxu0
      %622 = vmatprep.mubr.bf16.mxu0 0
      %623 = vmatmul.mubr.bf16.gmra.mrb[0].mxu0 %v485
      %v624 = vpop.f32.mrb[0].mxu0
      %v625 = vadd.f32 %v303, %v624
      %v626 = vpop.f32.mrb[0].mxu0
      %v627 = vpop.f32.mrb[0].mxu0
      %v628 = vadd.f32 %v303, %v627
      %v629 = vpop.f32.mrb[0].mxu0
      %630 = vmatprep.mubr.bf16.mxu0 0
      %631 = vmatmul.mubr.bf16.gmra.mrb[0].mxu0 %v488
      %v632 = vpop.f32.mrb[0].mxu0
      %v633 = vadd.f32 %v303, %v632
      %v634 = vpop.f32.mrb[0].mxu0
      %v635 = vpop.f32.mrb[0].mxu0
      %v636 = vadd.f32 %v303, %v635
      %v637 = vpop.f32.mrb[0].mxu0
      %638 = vmatprep.mubr.bf16.mxu0 0
      %639 = vmatmul.mubr.bf16.gmra.mrb[0].mxu0 %v491
      %v640 = vpop.f32.mrb[0].mxu0
      %v641 = vadd.f32 %v303, %v640
      %v642 = vpop.f32.mrb[0].mxu0
      %v643 = vpop.f32.mrb[0].mxu0
      %v644 = vadd.f32 %v303, %v643
      %v645 = vpop.f32.mrb[0].mxu0
      %646 = vmatprep.mubr.bf16.mxu0 0
      %647 = vmatmul.mubr.bf16.gmra.mrb[0].mxu0 %v494
      %v648 = vpop.f32.mrb[0].mxu0
      %v649 = vadd.f32 %v303, %v648
      %v650 = vpop.f32.mrb[0].mxu0
      %v651 = vpop.f32.mrb[0].mxu0
      %v652 = vadd.f32 %v303, %v651
      %v653 = vpop.f32.mrb[0].mxu0
      %654 = vmatprep.mubr.bf16.mxu0 0
      %655 = vmatmul.mubr.bf16.gmra.mrb[0].mxu0 %v497
      %v656 = vpop.f32.mrb[0].mxu0
      %v657 = vadd.f32 %v303, %v656
      %v658 = vpop.f32.mrb[0].mxu0
      %v659 = vpop.f32.mrb[0].mxu0
      %v660 = vadd.f32 %v303, %v659
      %v661 = vpop.f32.mrb[0].mxu0
      %662 = vmatprep.mubr.bf16.mxu0 0
      %663 = vmatmul.mubr.bf16.gmra.mrb[0].mxu0 %v500
      %v664 = vpop.f32.mrb[0].mxu0
      %v665 = vadd.f32 %v303, %v664
      %v666 = vpop.f32.mrb[0].mxu0
      %v667 = vpop.f32.mrb[0].mxu0
      %v668 = vadd.f32 %v303, %v667
      %v669 = vpop.f32.mrb[0].mxu0
      %670 = vmatprep.mubr.bf16.mxu0 0
      %671 = vmatmul.mubr.bf16.gmra.mrb[0].mxu0 %v503
      %v672 = vpop.f32.mrb[0].mxu0
      %v673 = vadd.f32 %v303, %v672
      %v674 = vpop.f32.mrb[0].mxu0
      %v675 = vpop.f32.mrb[0].mxu0
      %v676 = vadd.f32 %v303, %v675
      %v677 = vpop.f32.mrb[0].mxu0
      %678 = vmatprep.mubr.bf16.mxu0 0
      %679 = vmatmul.mubr.bf16.gmra.mrb[0].mxu0 %v506
      %v680 = vpop.f32.mrb[0].mxu0
      %v681 = vadd.f32 %v303, %v680
      %v682 = vpop.f32.mrb[0].mxu0
      %v683 = vpop.f32.mrb[0].mxu0
      %v684 = vadd.f32 %v303, %v683
      %v685 = vpop.f32.mrb[0].mxu0
      %686 = vmatprep.mubr.bf16.mxu0 0
      %687 = vmatmul.mubr.bf16.gmra.mrb[0].mxu0 %v509
      %v688 = vpop.f32.mrb[0].mxu0
      %v689 = vadd.f32 %v303, %v688
      %v690 = vpop.f32.mrb[0].mxu0
      %v691 = vpop.f32.mrb[0].mxu0
      %v692 = vadd.f32 %v303, %v691
      %v693 = vpop.f32.mrb[0].mxu0
      %694 = vmatprep.mubr.bf16.mxu0 0
      %695 = vmatmul.mubr.bf16.gmra.mrb[0].mxu0 %v512
      %v696 = vpop.f32.mrb[0].mxu0
      %v697 = vadd.f32 %v303, %v696
      %v698 = vpop.f32.mrb[0].mxu0
      %v699 = vpop.f32.mrb[0].mxu0
      %v700 = vadd.f32 %v303, %v699
      %v701 = vpop.f32.mrb[0].mxu0
      %702 = vmatprep.mubr.bf16.mxu0 0
      %703 = vmatmul.mubr.bf16.gmra.mrb[0].mxu0 %v515
      %v704 = vpop.f32.mrb[0].mxu0
      %v705 = vadd.f32 %v303, %v704
      %v706 = vpop.f32.mrb[0].mxu0
      %v707 = vpop.f32.mrb[0].mxu0
      %v708 = vadd.f32 %v303, %v707
      %v709 = vpop.f32.mrb[0].mxu0
      %710 = vmatprep.mubr.bf16.mxu0 0
      %711 = vmatmul.mubr.bf16.gmra.mrb[0].mxu0 %v518
      %v712 = vpop.f32.mrb[0].mxu0
      %v713 = vadd.f32 %v303, %v712
      %v714 = vpop.f32.mrb[0].mxu0
      %v715 = vpop.f32.mrb[0].mxu0
      %v716 = vadd.f32 %v303, %v715
      %v717 = vpop.f32.mrb[0].mxu0
      %718 = vmatprep.mubr.bf16.mxu0 0
      %719 = vmatmul.mubr.bf16.gmra.mrb[0].mxu0 %v521
      %v720 = vpop.f32.mrb[0].mxu0
      %v721 = vadd.f32 %v303, %v720
      %v722 = vpop.f32.mrb[0].mxu0
      %v723 = vpop.f32.mrb[0].mxu0
      %v724 = vadd.f32 %v303, %v723
      %v725 = vpop.f32.mrb[0].mxu0
      %726 = vmatprep.mubr.bf16.mxu0 0
      %727 = vmatmul.mubr.bf16.gmra.mrb[0].mxu0 %v524
      %v728 = vpop.f32.mrb[0].mxu0
      %v729 = vadd.f32 %v303, %v728
      %v730 = vpop.f32.mrb[0].mxu0
      %v731 = vpop.f32.mrb[0].mxu0
      %v732 = vadd.f32 %v303, %v731
      %v733 = vpop.f32.mrb[0].mxu0
      %734 = vmatprep.mubr.bf16.mxu0 0
      %735 = vmatmul.mubr.bf16.gmra.mrb[0].mxu0 %v527
      %v736 = vpop.f32.mrb[0].mxu0
      %v737 = vadd.f32 %v303, %v736
      %v738 = vpop.f32.mrb[0].mxu0
      %v739 = vpop.f32.mrb[0].mxu0
      %v740 = vadd.f32 %v303, %v739
      %v741 = vpop.f32.mrb[0].mxu0
      %742 = vmatprep.mubr.bf16.mxu0 0
      %743 = vmatmul.mubr.bf16.gmra.mrb[0].mxu0 %v530
      %v744 = vpop.f32.mrb[0].mxu0
      %v745 = vadd.f32 %v303, %v744
      %v746 = vpop.f32.mrb[0].mxu0
      %v747 = vpop.f32.mrb[0].mxu0
      %v748 = vadd.f32 %v303, %v747
      %v749 = vpop.f32.mrb[0].mxu0
      %750 = vmatprep.mubr.bf16.mxu0 0
      %751 = vmatmul.mubr.bf16.gmra.mrb[0].mxu0 %v533
      %v752 = vpop.f32.mrb[0].mxu0
      %v753 = vadd.f32 %v303, %v752
      %v754 = vpop.f32.mrb[0].mxu0
      %v755 = vpop.f32.mrb[0].mxu0
      %v756 = vadd.f32 %v303, %v755
      %v757 = vpop.f32.mrb[0].mxu0
      %758 = vmatprep.mubr.bf16.mxu0 0
      %759 = vmatmul.mubr.bf16.gmra.mrb[0].mxu0 %v536
      %v760 = vpop.f32.mrb[0].mxu0
      %v761 = vadd.f32 %v303, %v760
      %v762 = vpop.f32.mrb[0].mxu0
      %v763 = vpop.f32.mrb[0].mxu0
      %v764 = vadd.f32 %v303, %v763
      %v765 = vpop.f32.mrb[0].mxu0
      %766 = vmatprep.mubr.bf16.mxu0 0
      %767 = vmatmul.mubr.bf16.gmra.mrb[0].mxu0 %v539
      %v768 = vpop.f32.mrb[0].mxu0
      %v769 = vadd.f32 %v303, %v768
      %v770 = vpop.f32.mrb[0].mxu0
      %v771 = vpop.f32.mrb[0].mxu0
      %v772 = vadd.f32 %v303, %v771
      %v773 = vpop.f32.mrb[0].mxu0
      %774 = vmatprep.mubr.bf16.mxu0 0
      %775 = vmatmul.mubr.bf16.gmra.mrb[0].mxu0 %v542
      %v776 = vpop.f32.mrb[0].mxu0
      %v777 = vadd.f32 %v303, %v776
      %v778 = vpop.f32.mrb[0].mxu0
      %v779 = vpop.f32.mrb[0].mxu0
      %v780 = vadd.f32 %v303, %v779
      %v781 = vpop.f32.mrb[0].mxu0
      %782 = vmatprep.mubr.bf16.mxu0 0
      %783 = vmatmul.mubr.bf16.gmra.mrb[0].mxu0 %v545
      %v784 = vpop.f32.mrb[0].mxu0
      %v785 = vadd.f32 %v303, %v784
      %v786 = vpop.f32.mrb[0].mxu0
      %v787 = vpop.f32.mrb[0].mxu0
      %v788 = vadd.f32 %v303, %v787
      %v789 = vpop.f32.mrb[0].mxu0
      %790 = vmatprep.mubr.bf16.mxu0 0
      %791 = vmatmul.mubr.bf16.gmra.mrb[0].mxu0 %v548
      %v792 = vpop.f32.mrb[0].mxu0
      %v793 = vadd.f32 %v303, %v792
      %v794 = vpop.f32.mrb[0].mxu0
      %v795 = vpop.f32.mrb[0].mxu0
      %v796 = vadd.f32 %v303, %v795
      %v797 = vpop.f32.mrb[0].mxu0
      %798 = vmatprep.mubr.bf16.mxu0 0
      %799 = vmatmul.mubr.bf16.gmra.mrb[0].mxu0 %v551
      %v800 = vpop.f32.mrb[0].mxu0
      %v801 = vadd.f32 %v303, %v800
      %v802 = vpop.f32.mrb[0].mxu0
      %v803 = vpop.f32.mrb[0].mxu0
      %v804 = vadd.f32 %v303, %v803
      %v805 = vpop.f32.mrb[0].mxu0
      %806 = vmatprep.mubr.bf16.mxu0 0
      %807 = vmatmul.mubr.bf16.gmra.mrb[0].mxu0 %v554
      %v808 = vpop.f32.mrb[0].mxu0
      %v809 = vadd.f32 %v303, %v808
      %v810 = vpop.f32.mrb[0].mxu0
      %v811 = vpop.f32.mrb[0].mxu0
      %v812 = vadd.f32 %v303, %v811
      %v813 = vpop.f32.mrb[0].mxu0
      %814 = vmatprep.mubr.bf16.mxu0 0
      %815 = vmatmul.mubr.bf16.gmra.mrb[0].mxu0 %v557
      %v816 = vpop.f32.mrb[0].mxu0
      %v817 = vadd.f32 %v303, %v816
      %v818 = vpop.f32.mrb[0].mxu0
      %v819 = vpop.f32.mrb[0].mxu0
      %v820 = vadd.f32 %v303, %v819
      %v821 = vpop.f32.mrb[0].mxu0
      %822 = vmatprep.mubr.bf16.mxu0 0
      %823 = vmatmul.mubr.bf16.gmra.mrb[0].mxu0 %v560
      %v824 = vpop.f32.mrb[0].mxu0
      %v825 = vadd.f32 %v303, %v824
      %v826 = vpop.f32.mrb[0].mxu0
      %v827 = vpop.f32.mrb[0].mxu0
      %v828 = vadd.f32 %v303, %v827
      %v829 = vpop.f32.mrb[0].mxu0
      %830 = vmatprep.mubr.bf16.mxu0 0
      %831 = vmatmul.mubr.bf16.gmra.mrb[0].mxu0 %v563
      %v832 = vpop.f32.mrb[0].mxu0
      %v833 = vadd.f32 %v303, %v832
      %v834 = vpop.f32.mrb[0].mxu0
      %v835 = vpop.f32.mrb[0].mxu0
      %v836 = vadd.f32 %v303, %v835
      %v837 = vpop.f32.mrb[0].mxu0
      %838 = vmatprep.mubr.bf16.mxu0 0
      %839 = vmatmul.mubr.bf16.gmra.mrb[0].mxu0 %v566
      %v840 = vpop.f32.mrb[0].mxu0
      %v841 = vadd.f32 %v303, %v840
      %v842 = vpop.f32.mrb[0].mxu0
      %v843 = vpop.f32.mrb[0].mxu0
      %v844 = vadd.f32 %v303, %v843
      %v845 = vpop.f32.mrb[0].mxu0
      %846 = vmatprep.mubr.bf16.mxu0 0
      %847 = vmatmul.mubr.bf16.gmra.mrb[0].mxu0 %v569
      %v848 = vpop.f32.mrb[0].mxu0
      %v849 = vadd.f32 %v303, %v848
      %v850 = vpop.f32.mrb[0].mxu0
      %v851 = vpop.f32.mrb[0].mxu0
      %v852 = vadd.f32 %v303, %v851
      %v853 = vpop.f32.mrb[0].mxu0
      %854 = vmatprep.mubr.bf16.mxu0 0
      %855 = vmatmul.mubr.bf16.gmra.mrb[0].mxu0 %v572
      %v856 = vpop.f32.mrb[0].mxu0
      %v857 = vadd.f32 %v303, %v856
      %v858 = vpop.f32.mrb[0].mxu0
      %v859 = vpop.f32.mrb[0].mxu0
      %v860 = vadd.f32 %v303, %v859
      %v861 = vpop.f32.mrb[0].mxu0
      %862 = vdwg.mxu0
      %v863 = vmax.f32 %v609, 0.0
      %v864 = vmax.f32 %v612, 0.0
      %v865 = vmax.f32 %v617, 0.0
      %v866 = vmax.f32 %v620, 0.0
      %v867 = vmax.f32 %v625, 0.0
      %v868 = vmax.f32 %v628, 0.0
      %v869 = vmax.f32 %v633, 0.0
      %v870 = vmax.f32 %v636, 0.0
      %v871 = vmax.f32 %v641, 0.0
      %v872 = vmax.f32 %v644, 0.0
      %v873 = vmax.f32 %v649, 0.0
      %v874 = vmax.f32 %v652, 0.0
      %v875 = vmax.f32 %v657, 0.0
      %v876 = vmax.f32 %v660, 0.0
      %v877 = vmax.f32 %v665, 0.0
      %v878 = vmax.f32 %v668, 0.0
      %v879 = vmax.f32 %v673, 0.0
      %v880 = vmax.f32 %v676, 0.0
      %v881 = vmax.f32 %v681, 0.0
      %v882 = vmax.f32 %v684, 0.0
      %v883 = vmax.f32 %v689, 0.0
      %v884 = vmax.f32 %v692, 0.0
      %v885 = vmax.f32 %v697, 0.0
      %v886 = vmax.f32 %v700, 0.0
      %v887 = vmax.f32 %v705, 0.0
      %v888 = vmax.f32 %v708, 0.0
      %v889 = vmax.f32 %v713, 0.0
      %v890 = vmax.f32 %v716, 0.0
      %v891 = vmax.f32 %v721, 0.0
      %v892 = vmax.f32 %v724, 0.0
      %v893 = vmax.f32 %v729, 0.0
      %v894 = vmax.f32 %v732, 0.0
      %v895 = vmax.f32 %v737, 0.0
      %v896 = vmax.f32 %v740, 0.0
      %v897 = vmax.f32 %v745, 0.0
      %v898 = vmax.f32 %v748, 0.0
      %v899 = vmax.f32 %v753, 0.0
      %v900 = vmax.f32 %v756, 0.0
      %v901 = vmax.f32 %v761, 0.0
      %v902 = vmax.f32 %v764, 0.0
      %v903 = vmax.f32 %v769, 0.0
      %v904 = vmax.f32 %v772, 0.0
      %v905 = vmax.f32 %v777, 0.0
      %v906 = vmax.f32 %v780, 0.0
      %v907 = vmax.f32 %v785, 0.0
      %v908 = vmax.f32 %v788, 0.0
      %v909 = vmax.f32 %v793, 0.0
      %v910 = vmax.f32 %v796, 0.0
      %v911 = vmax.f32 %v801, 0.0
      %v912 = vmax.f32 %v804, 0.0
      %v913 = vmax.f32 %v809, 0.0
      %v914 = vmax.f32 %v812, 0.0
      %v915 = vmax.f32 %v817, 0.0
      %v916 = vmax.f32 %v820, 0.0
      %v917 = vmax.f32 %v825, 0.0
      %v918 = vmax.f32 %v828, 0.0
      %v919 = vmax.f32 %v833, 0.0
      %v920 = vmax.f32 %v836, 0.0
      %v921 = vmax.f32 %v841, 0.0
      %v922 = vmax.f32 %v844, 0.0
      %v923 = vmax.f32 %v849, 0.0
      %v924 = vmax.f32 %v852, 0.0
      %v925 = vmax.f32 %v857, 0.0
      %v926 = vmax.f32 %v860, 0.0
      %v927 = vld [vmem:[%s3] sm:$0x1]
      %v929 = vlaneseq
      %v930 = vshrl.u32 %v929, 7
      %v931 = vsub.s32 0, %v930
      %v932 = vrot.slane %v927, %v931
      %v934 = vmul.f32 %v863, %v932
      %v935 = vmul.f32 %v864, %v932
      %v936 = vmul.f32 %v865, %v932
      %v937 = vmul.f32 %v866, %v932
      %v938 = vmul.f32 %v867, %v932
      %v939 = vmul.f32 %v868, %v932
      %v940 = vmul.f32 %v869, %v932
      %v941 = vmul.f32 %v870, %v932
      %v942 = vmul.f32 %v871, %v932
      %v943 = vmul.f32 %v872, %v932
      %v944 = vmul.f32 %v873, %v932
      %v945 = vmul.f32 %v874, %v932
      %v946 = vmul.f32 %v875, %v932
      %v947 = vmul.f32 %v876, %v932
      %v948 = vmul.f32 %v877, %v932
      %v949 = vmul.f32 %v878, %v932
      %v950 = vmul.f32 %v879, %v932
      %v951 = vmul.f32 %v880, %v932
      %v952 = vmul.f32 %v881, %v932
      %v953 = vmul.f32 %v882, %v932
      %v954 = vmul.f32 %v883, %v932
      %v955 = vmul.f32 %v884, %v932
      %v956 = vmul.f32 %v885, %v932
      %v957 = vmul.f32 %v886, %v932
      %v958 = vmul.f32 %v887, %v932
      %v959 = vmul.f32 %v888, %v932
      %v960 = vmul.f32 %v889, %v932
      %v961 = vmul.f32 %v890, %v932
      %v962 = vmul.f32 %v891, %v932
      %v963 = vmul.f32 %v892, %v932
      %v964 = vmul.f32 %v893, %v932
      %v965 = vmul.f32 %v894, %v932
      %v966 = vmul.f32 %v895, %v932
      %v967 = vmul.f32 %v896, %v932
      %v968 = vmul.f32 %v897, %v932
      %v969 = vmul.f32 %v898, %v932
      %v970 = vmul.f32 %v899, %v932
      %v971 = vmul.f32 %v900, %v932
      %v972 = vmul.f32 %v901, %v932
      %v973 = vmul.f32 %v902, %v932
      %v974 = vmul.f32 %v903, %v932
      %v975 = vmul.f32 %v904, %v932
      %v976 = vmul.f32 %v905, %v932
      %v977 = vmul.f32 %v906, %v932
      %v978 = vmul.f32 %v907, %v932
      %v979 = vmul.f32 %v908, %v932
      %v980 = vmul.f32 %v909, %v932
      %v981 = vmul.f32 %v910, %v932
      %v982 = vmul.f32 %v911, %v932
      %v983 = vmul.f32 %v912, %v932
      %v984 = vmul.f32 %v913, %v932
      %v985 = vmul.f32 %v914, %v932
      %v986 = vmul.f32 %v915, %v932
      %v987 = vmul.f32 %v916, %v932
      %v988 = vmul.f32 %v917, %v932
      %v989 = vmul.f32 %v918, %v932
      %v990 = vmul.f32 %v919, %v932
      %v991 = vmul.f32 %v920, %v932
      %v992 = vmul.f32 %v921, %v932
      %v993 = vmul.f32 %v922, %v932
      %v994 = vmul.f32 %v923, %v932
      %v995 = vmul.f32 %v924, %v932
      %v996 = vmul.f32 %v925, %v932
      %v997 = vmul.f32 %v926, %v932
      %998 = vadd.xlane.f32.xlu0 %v934
      %v999 = vpop.xlane.xlu0 %998
      %1000 = vadd.xlane.f32.xlu0 %v935
      %v1001 = vpop.xlane.xlu0 %1000
      %1002 = vadd.xlane.f32.xlu0 %v936
      %v1003 = vpop.xlane.xlu0 %1002
      %1004 = vadd.xlane.f32.xlu0 %v937
      %v1005 = vpop.xlane.xlu0 %1004
      %1006 = vadd.xlane.f32.xlu0 %v938
      %v1007 = vpop.xlane.xlu0 %1006
      %1008 = vadd.xlane.f32.xlu0 %v939
      %v1009 = vpop.xlane.xlu0 %1008
      %1010 = vadd.xlane.f32.xlu0 %v940
      %v1011 = vpop.xlane.xlu0 %1010
      %1012 = vadd.xlane.f32.xlu0 %v941
      %v1013 = vpop.xlane.xlu0 %1012
      %1014 = vadd.xlane.f32.xlu0 %v942
      %v1015 = vpop.xlane.xlu0 %1014
      %1016 = vadd.xlane.f32.xlu0 %v943
      %v1017 = vpop.xlane.xlu0 %1016
      %1018 = vadd.xlane.f32.xlu0 %v944
      %v1019 = vpop.xlane.xlu0 %1018
      %1020 = vadd.xlane.f32.xlu0 %v945
      %v1021 = vpop.xlane.xlu0 %1020
      %1022 = vadd.xlane.f32.xlu0 %v946
      %v1023 = vpop.xlane.xlu0 %1022
      %1024 = vadd.xlane.f32.xlu0 %v947
      %v1025 = vpop.xlane.xlu0 %1024
      %1026 = vadd.xlane.f32.xlu0 %v948
      %v1027 = vpop.xlane.xlu0 %1026
      %1028 = vadd.xlane.f32.xlu0 %v949
      %v1029 = vpop.xlane.xlu0 %1028
      %1030 = vadd.xlane.f32.xlu0 %v950
      %v1031 = vpop.xlane.xlu0 %1030
      %1032 = vadd.xlane.f32.xlu0 %v951
      %v1033 = vpop.xlane.xlu0 %1032
      %1034 = vadd.xlane.f32.xlu0 %v952
      %v1035 = vpop.xlane.xlu0 %1034
      %1036 = vadd.xlane.f32.xlu0 %v953
      %v1037 = vpop.xlane.xlu0 %1036
      %1038 = vadd.xlane.f32.xlu0 %v954
      %v1039 = vpop.xlane.xlu0 %1038
      %1040 = vadd.xlane.f32.xlu0 %v955
      %v1041 = vpop.xlane.xlu0 %1040
      %1042 = vadd.xlane.f32.xlu0 %v956
      %v1043 = vpop.xlane.xlu0 %1042
      %1044 = vadd.xlane.f32.xlu0 %v957
      %v1045 = vpop.xlane.xlu0 %1044
      %1046 = vadd.xlane.f32.xlu0 %v958
      %v1047 = vpop.xlane.xlu0 %1046
      %1048 = vadd.xlane.f32.xlu0 %v959
      %v1049 = vpop.xlane.xlu0 %1048
      %1050 = vadd.xlane.f32.xlu0 %v960
      %v1051 = vpop.xlane.xlu0 %1050
      %1052 = vadd.xlane.f32.xlu0 %v961
      %v1053 = vpop.xlane.xlu0 %1052
      %1054 = vadd.xlane.f32.xlu0 %v962
      %v1055 = vpop.xlane.xlu0 %1054
      %1056 = vadd.xlane.f32.xlu0 %v963
      %v1057 = vpop.xlane.xlu0 %1056
      %1058 = vadd.xlane.f32.xlu0 %v964
      %v1059 = vpop.xlane.xlu0 %1058
      %1060 = vadd.xlane.f32.xlu0 %v965
      %v1061 = vpop.xlane.xlu0 %1060
      %1062 = vadd.xlane.f32.xlu0 %v966
      %v1063 = vpop.xlane.xlu0 %1062
      %1064 = vadd.xlane.f32.xlu0 %v967
      %v1065 = vpop.xlane.xlu0 %1064
      %1066 = vadd.xlane.f32.xlu0 %v968
      %v1067 = vpop.xlane.xlu0 %1066
      %1068 = vadd.xlane.f32.xlu0 %v969
      %v1069 = vpop.xlane.xlu0 %1068
      %1070 = vadd.xlane.f32.xlu0 %v970
      %v1071 = vpop.xlane.xlu0 %1070
      %1072 = vadd.xlane.f32.xlu0 %v971
      %v1073 = vpop.xlane.xlu0 %1072
      %1074 = vadd.xlane.f32.xlu0 %v972
      %v1075 = vpop.xlane.xlu0 %1074
      %1076 = vadd.xlane.f32.xlu0 %v973
      %v1077 = vpop.xlane.xlu0 %1076
      %1078 = vadd.xlane.f32.xlu0 %v974
      %v1079 = vpop.xlane.xlu0 %1078
      %1080 = vadd.xlane.f32.xlu0 %v975
      %v1081 = vpop.xlane.xlu0 %1080
      %1082 = vadd.xlane.f32.xlu0 %v976
      %v1083 = vpop.xlane.xlu0 %1082
      %1084 = vadd.xlane.f32.xlu0 %v977
      %v1085 = vpop.xlane.xlu0 %1084
      %1086 = vadd.xlane.f32.xlu0 %v978
      %v1087 = vpop.xlane.xlu0 %1086
      %1088 = vadd.xlane.f32.xlu0 %v979
      %v1089 = vpop.xlane.xlu0 %1088
      %1090 = vadd.xlane.f32.xlu0 %v980
      %v1091 = vpop.xlane.xlu0 %1090
      %1092 = vadd.xlane.f32.xlu0 %v981
      %v1093 = vpop.xlane.xlu0 %1092
      %1094 = vadd.xlane.f32.xlu0 %v982
      %v1095 = vpop.xlane.xlu0 %1094
      %1096 = vadd.xlane.f32.xlu0 %v983
      %v1097 = vpop.xlane.xlu0 %1096
      %1098 = vadd.xlane.f32.xlu0 %v984
      %v1099 = vpop.xlane.xlu0 %1098
      %1100 = vadd.xlane.f32.xlu0 %v985
      %v1101 = vpop.xlane.xlu0 %1100
      %1102 = vadd.xlane.f32.xlu0 %v986
      %v1103 = vpop.xlane.xlu0 %1102
      %1104 = vadd.xlane.f32.xlu0 %v987
      %v1105 = vpop.xlane.xlu0 %1104
      %1106 = vadd.xlane.f32.xlu0 %v988
      %v1107 = vpop.xlane.xlu0 %1106
      %1108 = vadd.xlane.f32.xlu0 %v989
      %v1109 = vpop.xlane.xlu0 %1108
      %1110 = vadd.xlane.f32.xlu0 %v990
      %v1111 = vpop.xlane.xlu0 %1110
      %1112 = vadd.xlane.f32.xlu0 %v991
      %v1113 = vpop.xlane.xlu0 %1112
      %1114 = vadd.xlane.f32.xlu0 %v992
      %v1115 = vpop.xlane.xlu0 %1114
      %1116 = vadd.xlane.f32.xlu0 %v993
      %v1117 = vpop.xlane.xlu0 %1116
      %1118 = vadd.xlane.f32.xlu0 %v994
      %v1119 = vpop.xlane.xlu0 %1118
      %1120 = vadd.xlane.f32.xlu0 %v995
      %v1121 = vpop.xlane.xlu0 %1120
      %1122 = vadd.xlane.f32.xlu0 %v996
      %v1123 = vpop.xlane.xlu0 %1122
      %1124 = vadd.xlane.f32.xlu0 %v997
      %v1125 = vpop.xlane.xlu0 %1124
      %s1126 = sld [smem:[#allocation2]]
      %v1127 = vstv %s1126
      %v1128 = vadd.f32 %v999, %v1127
      %v1129 = vadd.f32 %v1001, %v1127
      %v1130 = vadd.f32 %v1003, %v1127
      %v1131 = vadd.f32 %v1005, %v1127
      %v1132 = vadd.f32 %v1007, %v1127
      %v1133 = vadd.f32 %v1009, %v1127
      %v1134 = vadd.f32 %v1011, %v1127
      %v1135 = vadd.f32 %v1013, %v1127
      %v1136 = vadd.f32 %v1015, %v1127
      %v1137 = vadd.f32 %v1017, %v1127
      %v1138 = vadd.f32 %v1019, %v1127
      %v1139 = vadd.f32 %v1021, %v1127
      %v1140 = vadd.f32 %v1023, %v1127
      %v1141 = vadd.f32 %v1025, %v1127
      %v1142 = vadd.f32 %v1027, %v1127
      %v1143 = vadd.f32 %v1029, %v1127
      %v1144 = vadd.f32 %v1031, %v1127
      %v1145 = vadd.f32 %v1033, %v1127
      %v1146 = vadd.f32 %v1035, %v1127
      %v1147 = vadd.f32 %v1037, %v1127
      %v1148 = vadd.f32 %v1039, %v1127
      %v1149 = vadd.f32 %v1041, %v1127
      %v1150 = vadd.f32 %v1043, %v1127
      %v1151 = vadd.f32 %v1045, %v1127
      %v1152 = vadd.f32 %v1047, %v1127
      %v1153 = vadd.f32 %v1049, %v1127
      %v1154 = vadd.f32 %v1051, %v1127
      %v1155 = vadd.f32 %v1053, %v1127
      %v1156 = vadd.f32 %v1055, %v1127
      %v1157 = vadd.f32 %v1057, %v1127
      %v1158 = vadd.f32 %v1059, %v1127
      %v1159 = vadd.f32 %v1061, %v1127
      %v1160 = vadd.f32 %v1063, %v1127
      %v1161 = vadd.f32 %v1065, %v1127
      %v1162 = vadd.f32 %v1067, %v1127
      %v1163 = vadd.f32 %v1069, %v1127
      %v1164 = vadd.f32 %v1071, %v1127
      %v1165 = vadd.f32 %v1073, %v1127
      %v1166 = vadd.f32 %v1075, %v1127
      %v1167 = vadd.f32 %v1077, %v1127
      %v1168 = vadd.f32 %v1079, %v1127
      %v1169 = vadd.f32 %v1081, %v1127
      %v1170 = vadd.f32 %v1083, %v1127
      %v1171 = vadd.f32 %v1085, %v1127
      %v1172 = vadd.f32 %v1087, %v1127
      %v1173 = vadd.f32 %v1089, %v1127
      %v1174 = vadd.f32 %v1091, %v1127
      %v1175 = vadd.f32 %v1093, %v1127
      %v1176 = vadd.f32 %v1095, %v1127
      %v1177 = vadd.f32 %v1097, %v1127
      %v1178 = vadd.f32 %v1099, %v1127
      %v1179 = vadd.f32 %v1101, %v1127
      %v1180 = vadd.f32 %v1103, %v1127
      %v1181 = vadd.f32 %v1105, %v1127
      %v1182 = vadd.f32 %v1107, %v1127
      %v1183 = vadd.f32 %v1109, %v1127
      %v1184 = vadd.f32 %v1111, %v1127
      %v1185 = vadd.f32 %v1113, %v1127
      %v1186 = vadd.f32 %v1115, %v1127
      %v1187 = vadd.f32 %v1117, %v1127
      %v1188 = vadd.f32 %v1119, %v1127
      %v1189 = vadd.f32 %v1121, %v1127
      %v1190 = vadd.f32 %v1123, %v1127
      %v1191 = vadd.f32 %v1125, %v1127
      %vm1192 = vcmask 7168
      %1193 = vst.msk [vmem:[%s227] sm:$0xff] %vm1192, %v1128
      %1194 = vst.msk [vmem:[%s227 + $0x8] sm:$0xff] %vm1192, %v1129
      %1195 = vst.msk [vmem:[%s227 + $0x10] sm:$0xff] %vm1192, %v1130
      %1196 = vst.msk [vmem:[%s227 + $0x18] sm:$0xff] %vm1192, %v1131
      %1197 = vst.msk [vmem:[%s227 + $0x20] sm:$0xff] %vm1192, %v1132
      %1198 = vst.msk [vmem:[%s227 + $0x28] sm:$0xff] %vm1192, %v1133
      %1199 = vst.msk [vmem:[%s227 + $0x30] sm:$0xff] %vm1192, %v1134
      %1200 = vst.msk [vmem:[%s227 + $0x38] sm:$0xff] %vm1192, %v1135
      %1201 = vst.msk [vmem:[%s227 + $0x40] sm:$0xff] %vm1192, %v1136
      %1202 = vst.msk [vmem:[%s227 + $0x48] sm:$0xff] %vm1192, %v1137
      %1203 = vst.msk [vmem:[%s227 + $0x50] sm:$0xff] %vm1192, %v1138
      %1204 = vst.msk [vmem:[%s227 + $0x58] sm:$0xff] %vm1192, %v1139
      %1205 = vst.msk [vmem:[%s227 + $0x60] sm:$0xff] %vm1192, %v1140
      %1206 = vst.msk [vmem:[%s227 + $0x68] sm:$0xff] %vm1192, %v1141
      %1207 = vst.msk [vmem:[%s227 + $0x70] sm:$0xff] %vm1192, %v1142
      %1208 = vst.msk [vmem:[%s227 + $0x78] sm:$0xff] %vm1192, %v1143
      %1209 = vst.msk [vmem:[%s227 + $0x80] sm:$0xff] %vm1192, %v1144
      %1210 = vst.msk [vmem:[%s227 + $0x88] sm:$0xff] %vm1192, %v1145
      %1211 = vst.msk [vmem:[%s227 + $0x90] sm:$0xff] %vm1192, %v1146
      %1212 = vst.msk [vmem:[%s227 + $0x98] sm:$0xff] %vm1192, %v1147
      %1213 = vst.msk [vmem:[%s227 + $0xa0] sm:$0xff] %vm1192, %v1148
      %1214 = vst.msk [vmem:[%s227 + $0xa8] sm:$0xff] %vm1192, %v1149
      %1215 = vst.msk [vmem:[%s227 + $0xb0] sm:$0xff] %vm1192, %v1150
      %1216 = vst.msk [vmem:[%s227 + $0xb8] sm:$0xff] %vm1192, %v1151
      %1217 = vst.msk [vmem:[%s227 + $0xc0] sm:$0xff] %vm1192, %v1152
      %1218 = vst.msk [vmem:[%s227 + $0xc8] sm:$0xff] %vm1192, %v1153
      %1219 = vst.msk [vmem:[%s227 + $0xd0] sm:$0xff] %vm1192, %v1154
      %1220 = vst.msk [vmem:[%s227 + $0xd8] sm:$0xff] %vm1192, %v1155
      %1221 = vst.msk [vmem:[%s227 + $0xe0] sm:$0xff] %vm1192, %v1156
      %1222 = vst.msk [vmem:[%s227 + $0xe8] sm:$0xff] %vm1192, %v1157
      %1223 = vst.msk [vmem:[%s227 + $0xf0] sm:$0xff] %vm1192, %v1158
      %1224 = vst.msk [vmem:[%s227 + $0xf8] sm:$0xff] %vm1192, %v1159
      %1225 = vst.msk [vmem:[%s227 + $0x100] sm:$0xff] %vm1192, %v1160
      %1226 = vst.msk [vmem:[%s227 + $0x108] sm:$0xff] %vm1192, %v1161
      %1227 = vst.msk [vmem:[%s227 + $0x110] sm:$0xff] %vm1192, %v1162
      %1228 = vst.msk [vmem:[%s227 + $0x118] sm:$0xff] %vm1192, %v1163
      %1229 = vst.msk [vmem:[%s227 + $0x120] sm:$0xff] %vm1192, %v1164
      %1230 = vst.msk [vmem:[%s227 + $0x128] sm:$0xff] %vm1192, %v1165
      %1231 = vst.msk [vmem:[%s227 + $0x130] sm:$0xff] %vm1192, %v1166
      %1232 = vst.msk [vmem:[%s227 + $0x138] sm:$0xff] %vm1192, %v1167
      %1233 = vst.msk [vmem:[%s227 + $0x140] sm:$0xff] %vm1192, %v1168
      %1234 = vst.msk [vmem:[%s227 + $0x148] sm:$0xff] %vm1192, %v1169
      %1235 = vst.msk [vmem:[%s227 + $0x150] sm:$0xff] %vm1192, %v1170
      %1236 = vst.msk [vmem:[%s227 + $0x158] sm:$0xff] %vm1192, %v1171
      %1237 = vst.msk [vmem:[%s227 + $0x160] sm:$0xff] %vm1192, %v1172
      %1238 = vst.msk [vmem:[%s227 + $0x168] sm:$0xff] %vm1192, %v1173
      %1239 = vst.msk [vmem:[%s227 + $0x170] sm:$0xff] %vm1192, %v1174
      %1240 = vst.msk [vmem:[%s227 + $0x178] sm:$0xff] %vm1192, %v1175
      %1241 = vst.msk [vmem:[%s227 + $0x180] sm:$0xff] %vm1192, %v1176
      %1242 = vst.msk [vmem:[%s227 + $0x188] sm:$0xff] %vm1192, %v1177
      %1243 = vst.msk [vmem:[%s227 + $0x190] sm:$0xff] %vm1192, %v1178
      %1244 = vst.msk [vmem:[%s227 + $0x198] sm:$0xff] %vm1192, %v1179
      %1245 = vst.msk [vmem:[%s227 + $0x1a0] sm:$0xff] %vm1192, %v1180
      %1246 = vst.msk [vmem:[%s227 + $0x1a8] sm:$0xff] %vm1192, %v1181
      %1247 = vst.msk [vmem:[%s227 + $0x1b0] sm:$0xff] %vm1192, %v1182
      %1248 = vst.msk [vmem:[%s227 + $0x1b8] sm:$0xff] %vm1192, %v1183
      %1249 = vst.msk [vmem:[%s227 + $0x1c0] sm:$0xff] %vm1192, %v1184
      %1250 = vst.msk [vmem:[%s227 + $0x1c8] sm:$0xff] %vm1192, %v1185
      %1251 = vst.msk [vmem:[%s227 + $0x1d0] sm:$0xff] %vm1192, %v1186
      %1252 = vst.msk [vmem:[%s227 + $0x1d8] sm:$0xff] %vm1192, %v1187
      %1253 = vst.msk [vmem:[%s227 + $0x1e0] sm:$0xff] %vm1192, %v1188
      %1254 = vst.msk [vmem:[%s227 + $0x1e8] sm:$0xff] %vm1192, %v1189
      %1255 = vst.msk [vmem:[%s227 + $0x1f0] sm:$0xff] %vm1192, %v1190
      %1256 = vst.msk [vmem:[%s227 + $0x1f8] sm:$0xff] %vm1192, %v1191
      %s1257 = smul.u32 64, %s17
      %p1258 = scmp.lt.s32.totalorder %s1257, 127
      %s1259 = scalar_select %p1258, %s1257, 127
      %s1260 = smul.addr %s1259, 8
      %s1261 = scalar_lea.vmem %s5, %s1260
      // Predicated region
      $region41: #{base_model_forward.1} parent=39 // pred_check
        %p1262 = pneg %p145
      $region42: #{base_model_forward.1} parent=39 // pred_check_branch
        %1264 = sbr.rel (%p1262) target = $region44
      $region43: #{base_model_forward.1} parent=39 // pred_region
        %s1265 = smul.u32 64, %s17
      $region44: #{base_model_forward.1} parent=39 // pred_fallthru
        _
    $region40: #{base_model_forward.1} parent=5 // pred_fallthru
      _
    %p1266 = scmp.le.s32.totalorder 2, %s12
    // Predicated region
    $region45: #{base_model_forward.1} parent=5 // pred_check
      %p1267 = pneg %p1266
    $region46: #{base_model_forward.1} parent=5 // pred_check_branch
      %1269 = sbr.rel (%p1267) target = $region48
    $region47: #{base_model_forward.1} parent=5 // pred_region
      %s1270 = ssub.s32 %s12, 2
      // Predicated region
      $region49: #{base_model_forward.1} parent=47 // pred_check
        %p1271 = pneg %p151
      $region50: #{base_model_forward.1} parent=47 // pred_check_branch
        %1273 = sbr.rel (%p1271) target = $region52
      $region51: #{base_model_forward.1} parent=47 // pred_region
        %s1274 = smul.u32 64, %s18
        %p1275 = scmp.lt.s32.totalorder %s1274, 127
        %s1276 = scalar_select %p1275, %s1274, 127
        %s1277 = smul.addr %s1276, 8
        %s1278 = scalar_lea.vmem %s5, %s1277
      $region52: #{base_model_forward.1} parent=47 // pred_fallthru
        _
    $region48: #{base_model_forward.1} parent=5 // pred_fallthru
      _
  $region6: #{base_model_forward.1} parent=0 // loop_footer
    %s16 = sadd.s32 1, %s12
  $region7: #{base_model_forward.1} parent=0 // loop_footer_branch
    %11 = sbr.rel target = $region3
  $region8: #{base_model_forward.1} parent=0 // loop_exit
    _

</llo_original>
